<compile_context>
chip_gen: v6e
topology: v6e:2x2x1
jax: 0.10.0
libtpu: 0.0.40
codegen_flags: <defaults>
</compile_context>

<pallas_src>
import numpy as np
import jax
import jax.numpy as jnp
from jax.experimental import pallas as pl
from jax.experimental.pallas import tpu as pltpu

# KarateClub-like sizes
N_NODES = 34
N_FEATURES = 34
N_CLASSES = 4
HID1, HID2, HID3 = 16, 4, 2

# ---- packed-parameter slab layout: one (P_ROWS, 128) f32 operand ---------------
# All regions start on a multiple of 8 rows so each in-kernel slice is an aligned
# (8,128)-tile view (no relayout / XLU rotate in the prologue).
P_LANES = 128
ROW_W1 = 0        # (34, 16)
ROW_B1 = 40       # (1, 16)
ROW_W2 = 48       # (16, 4)
ROW_B2 = 64       # (1, 4)
ROW_W3 = 72       # (4, 2)
ROW_B3 = 80       # (1, 2)
ROW_WC = 88       # (2, 4)
ROW_BC = 96       # (1, 4)
P_ROWS = 104      # multiple of 8

# output slab: logits in lanes [0:4), embedding in lanes [4:6), rest zero
OUT_LANES = 128


def gcn_kernel(ahat_ref, x_ref, p_ref, o_ref):
    """Fused forward: 3x (A_hat @ (H @ W) + b, tanh) + Linear classifier."""
    n = ahat_ref.shape[0]

    # ---- 8-row-aligned static slices of the packed parameter slab --------------
    w1 = p_ref[ROW_W1:ROW_W1 + N_FEATURES, 0:HID1]
    b1 = p_ref[ROW_B1:ROW_B1 + 1, 0:HID1]
    w2 = p_ref[ROW_W2:ROW_W2 + HID1, 0:HID2]
    b2 = p_ref[ROW_B2:ROW_B2 + 1, 0:HID2]
    w3 = p_ref[ROW_W3:ROW_W3 + HID2, 0:HID3]
    b3 = p_ref[ROW_B3:ROW_B3 + 1, 0:HID3]
    wc = p_ref[ROW_WC:ROW_WC + HID3, 0:N_CLASSES]
    bc = p_ref[ROW_BC:ROW_BC + 1, 0:N_CLASSES]

    # bf16 MXU operands, f32 accumulation (fewer emulation passes per matmul)
    a_bf = ahat_ref[...].astype(jnp.bfloat16)

    # conv1: GCNConv(F -> 16), tanh   (keep A @ (H @ W): contract features first)
    hw = jnp.dot(x_ref[...].astype(jnp.bfloat16), w1.astype(jnp.bfloat16),
                 preferred_element_type=jnp.float32)
    h = jnp.tanh(jnp.dot(a_bf, hw.astype(jnp.bfloat16),
                         preferred_element_type=jnp.float32) + b1)

    # conv2: GCNConv(16 -> 4), tanh
    hw = jnp.dot(h.astype(jnp.bfloat16), w2.astype(jnp.bfloat16),
                 preferred_element_type=jnp.float32)
    h = jnp.tanh(jnp.dot(a_bf, hw.astype(jnp.bfloat16),
                         preferred_element_type=jnp.float32) + b2)

    # conv3: GCNConv(4 -> 2), tanh
    # K=4 contraction on the VPU (broadcast FMAs) -- no MXU FIFO round-trip.
    hw = (h[:, 0:1] * w3[0:1, :] + h[:, 1:2] * w3[1:2, :]
          + h[:, 2:3] * w3[2:3, :] + h[:, 3:4] * w3[3:4, :])
    h = jnp.tanh(jnp.dot(a_bf, hw.astype(jnp.bfloat16),
                         preferred_element_type=jnp.float32) + b3)

    # classifier: Linear(2 -> num_classes); K=2 contraction on the VPU.
    logits = h[:, 0:1] * wc[0:1, :] + h[:, 1:2] * wc[1:2, :] + bc

    # single lane-dense (n, 128) slab assembled in registers -> ONE unmasked store
    pad = jnp.zeros((n, OUT_LANES - N_CLASSES - HID3), jnp.float32)
    o_ref[...] = jnp.concatenate([logits, h, pad], axis=1)


def edges_to_adjacency(edge_index, num_nodes):
    """Single scatter: raw dense binary adjacency (no self-loops).

    The graph is static, so this is built once and cached."""
    # TODO(synk): the edge_index scatter has no clean single-block Pallas
    # equivalent; it is the only plain-XLA op left and runs once per graph.
    src, dst = edge_index[0], edge_index[1]
    adj = jnp.zeros((num_nodes, num_nodes), dtype=jnp.float32)
    return adj.at[src, dst].set(1.0)


def normalize_adjacency(adj):
    """A_hat = D^-1/2 (A + I) D^-1/2, precomputed ONCE for the static graph."""
    n = adj.shape[0]
    a = adj + jnp.eye(n, dtype=adj.dtype)
    deg = jnp.sum(a, axis=1)
    dinv = jnp.where(deg > 0, jax.lax.rsqrt(deg), 0.0)   # deg>0 guard restored
    return dinv[:, None] * a * dinv[None, :]


@jax.jit
def gcn_forward(x, a_hat, p_slab):
    n = x.shape[0]
    slab = pl.pallas_call(
        gcn_kernel,
        out_shape=jax.ShapeDtypeStruct((n, OUT_LANES), jnp.float32),
        in_specs=[pl.BlockSpec(memory_space=pltpu.MemorySpace.VMEM)] * 3,
        out_specs=pl.BlockSpec(memory_space=pltpu.MemorySpace.VMEM),
        cost_estimate=pl.CostEstimate(flops=100_000, transcendentals=1_000,
                                      bytes_accessed=60_000),
    )(a_hat, x, p_slab)
    out = slab[:, :N_CLASSES]
    h = slab[:, N_CLASSES:N_CLASSES + HID3]
    return out, h


def init_params(key):
    """Deterministic glorot-uniform weights, zero biases."""
    def glorot(k, fan_in, fan_out):
        limit = np.sqrt(6.0 / (fan_in + fan_out))
        return jax.random.uniform(k, (fan_in, fan_out), jnp.float32, -limit, limit)

    k1, k2, k3, k4 = jax.random.split(key, 4)
    w1 = glorot(k1, N_FEATURES, HID1); b1 = jnp.zeros((1, HID1), jnp.float32)
    w2 = glorot(k2, HID1, HID2);       b2 = jnp.zeros((1, HID2), jnp.float32)
    w3 = glorot(k3, HID2, HID3);       b3 = jnp.zeros((1, HID3), jnp.float32)
    wc = glorot(k4, HID3, N_CLASSES);  bc = jnp.zeros((1, N_CLASSES), jnp.float32)
    return (w1, b1, w2, b2, w3, b3, wc, bc)


def pack_params(params):
    """Pack all weights/biases into one 8-row-aligned (104, 128) f32 slab (once)."""
    w1, b1, w2, b2, w3, b3, wc, bc = [np.asarray(p, np.float32) for p in params]
    slab = np.zeros((P_ROWS, P_LANES), np.float32)
    slab[ROW_W1:ROW_W1 + N_FEATURES, :HID1] = w1
    slab[ROW_B1, :HID1] = b1.reshape(-1)
    slab[ROW_W2:ROW_W2 + HID1, :HID2] = w2
    slab[ROW_B2, :HID2] = b2.reshape(-1)
    slab[ROW_W3:ROW_W3 + HID2, :HID3] = w3
    slab[ROW_B3, :HID3] = b3.reshape(-1)
    slab[ROW_WC:ROW_WC + HID3, :N_CLASSES] = wc
    slab[ROW_BC, :N_CLASSES] = bc.reshape(-1)
    return jnp.asarray(slab)


def gcn_reference(x, edge_index, params):
    """Pure-JAX f32 reference of the original forward (for a sanity check)."""
    w1, b1, w2, b2, w3, b3, wc, bc = params
    n = x.shape[0]
    adj = edges_to_adjacency(edge_index, n) + jnp.eye(n, dtype=jnp.float32)
    deg = jnp.sum(adj, axis=1)
    dinv = jnp.where(deg > 0, 1.0 / jnp.sqrt(deg), 0.0)
    a_hat = dinv[:, None] * adj * dinv[None, :]
    h = jnp.tanh(a_hat @ (x @ w1) + b1)
    h = jnp.tanh(a_hat @ (h @ w2) + b2)
    h = jnp.tanh(a_hat @ (h @ w3) + b3)
    return h @ wc + bc, h


if __name__ == "__main__":
    key = jax.random.PRNGKey(0)
    k_adj, k_x, k_w = jax.random.split(key, 3)

    # Deterministic synthetic undirected graph (Karate-club sized)
    probs = jax.random.uniform(k_adj, (N_NODES, N_NODES))
    sym = (probs + probs.T) * 0.5
    adj_np = np.asarray((sym > 0.75) & ~np.eye(N_NODES, dtype=bool))
    src, dst = np.nonzero(adj_np)
    edge_index = jnp.asarray(np.stack([src, dst], axis=0), dtype=jnp.int32)  # (2, E)

    # Node features: identity-like one-hot features (N x N_FEATURES) + perturbation
    x = jnp.eye(N_NODES, N_FEATURES, dtype=jnp.float32)
    x = x + 0.01 * jax.random.normal(k_x, (N_NODES, N_FEATURES), jnp.float32)

    params = init_params(k_w)
    p_slab = pack_params(params)                           # packed once (static)
    adj = edges_to_adjacency(edge_index, N_NODES)          # built once (static graph)
    a_hat = normalize_adjacency(adj)                       # normalized once (static)
    a_hat = jax.block_until_ready(a_hat)

    out, h = gcn_forward(x, a_hat, p_slab)
    jax.block_until_ready((out, h))

    assert out.shape == (N_NODES, N_CLASSES)
    assert h.shape == (N_NODES, HID3)
    assert jnp.all(jnp.isfinite(out)) and jnp.all(jnp.isfinite(h))

    # sanity check against pure-JAX f32 reference (loose tol: bf16 MXU inputs)
    out_ref, h_ref = gcn_reference(x, edge_index, params)
    np.testing.assert_allclose(np.asarray(out), np.asarray(out_ref), atol=5e-2, rtol=5e-2)
    np.testing.assert_allclose(np.asarray(h), np.asarray(h_ref), atol=5e-2, rtol=5e-2)

    print("KERNEL_OK")
</pallas_src>

<mosaic_0001>
module attributes {stable_mosaic.version = 11 : i64} {
  func.func @gcn_kernel(%arg0: memref<34x34xf32, #tpu.memory_space<vmem>>, %arg1: memref<34x34xf32, #tpu.memory_space<vmem>>, %arg2: memref<104x128xf32, #tpu.memory_space<vmem>>, %arg3: memref<34x128xf32, #tpu.memory_space<vmem>>) attributes {dimension_semantics = [], scalar_prefetch = 0 : i64, scratch_operands = 0 : i64, tpu.core_type = #tpu.core_type<tc>} {
    %c0 = arith.constant 0 : index
    %c0_0 = arith.constant 0 : index
    %0 = vector.load %arg2[%c0, %c0_0] : memref<104x128xf32, #tpu.memory_space<vmem>>, vector<34x16xf32>
    %c40 = arith.constant 40 : index
    %c0_1 = arith.constant 0 : index
    %1 = vector.load %arg2[%c40, %c0_1] : memref<104x128xf32, #tpu.memory_space<vmem>>, vector<1x16xf32>
    %c48 = arith.constant 48 : index
    %c0_2 = arith.constant 0 : index
    %2 = vector.load %arg2[%c48, %c0_2] : memref<104x128xf32, #tpu.memory_space<vmem>>, vector<16x4xf32>
    %c64 = arith.constant 64 : index
    %c0_3 = arith.constant 0 : index
    %3 = vector.load %arg2[%c64, %c0_3] : memref<104x128xf32, #tpu.memory_space<vmem>>, vector<1x4xf32>
    %c72 = arith.constant 72 : index
    %c0_4 = arith.constant 0 : index
    %4 = vector.load %arg2[%c72, %c0_4] : memref<104x128xf32, #tpu.memory_space<vmem>>, vector<4x2xf32>
    %c80 = arith.constant 80 : index
    %c0_5 = arith.constant 0 : index
    %5 = vector.load %arg2[%c80, %c0_5] : memref<104x128xf32, #tpu.memory_space<vmem>>, vector<1x2xf32>
    %c88 = arith.constant 88 : index
    %c0_6 = arith.constant 0 : index
    %6 = vector.load %arg2[%c88, %c0_6] : memref<104x128xf32, #tpu.memory_space<vmem>>, vector<2x4xf32>
    %c96 = arith.constant 96 : index
    %c0_7 = arith.constant 0 : index
    %7 = vector.load %arg2[%c96, %c0_7] : memref<104x128xf32, #tpu.memory_space<vmem>>, vector<1x4xf32>
    %c0_8 = arith.constant 0 : index
    %c0_9 = arith.constant 0 : index
    %8 = vector.load %arg0[%c0_8, %c0_9] : memref<34x34xf32, #tpu.memory_space<vmem>>, vector<34x34xf32>
    %9 = arith.truncf %8 : vector<34x34xf32> to vector<34x34xbf16>
    %c0_10 = arith.constant 0 : index
    %c0_11 = arith.constant 0 : index
    %10 = vector.load %arg1[%c0_10, %c0_11] : memref<34x34xf32, #tpu.memory_space<vmem>>, vector<34x34xf32>
    %11 = arith.truncf %10 : vector<34x34xf32> to vector<34x34xbf16>
    %12 = arith.truncf %0 : vector<34x16xf32> to vector<34x16xbf16>
    %cst = arith.constant dense<0.000000e+00> : vector<34x16xf32>
    %13 = tpu.matmul %11, %12, %cst {dimension_numbers = #tpu.dot_dimension_numbers<[1], [0], [0], [1], [0, 0, 1, 1], [], []>} : vector<34x34xbf16>, vector<34x16xbf16>, vector<34x16xf32> -> vector<34x16xf32>
    %14 = arith.truncf %13 : vector<34x16xf32> to vector<34x16xbf16>
    %cst_12 = arith.constant dense<0.000000e+00> : vector<34x16xf32>
    %15 = tpu.matmul %9, %14, %cst_12 {dimension_numbers = #tpu.dot_dimension_numbers<[1], [0], [0], [1], [0, 0, 1, 1], [], []>} : vector<34x34xbf16>, vector<34x16xbf16>, vector<34x16xf32> -> vector<34x16xf32>
    %16 = vector.broadcast %1 : vector<1x16xf32> to vector<34x16xf32>
    %17 = arith.addf %15, %16 : vector<34x16xf32>
    %18 = math.tanh %17 : vector<34x16xf32>
    %19 = arith.truncf %18 : vector<34x16xf32> to vector<34x16xbf16>
    %20 = arith.truncf %2 : vector<16x4xf32> to vector<16x4xbf16>
    %cst_13 = arith.constant dense<0.000000e+00> : vector<34x4xf32>
    %21 = tpu.matmul %19, %20, %cst_13 {dimension_numbers = #tpu.dot_dimension_numbers<[1], [0], [0], [1], [0, 0, 1, 1], [], []>} : vector<34x16xbf16>, vector<16x4xbf16>, vector<34x4xf32> -> vector<34x4xf32>
    %22 = arith.truncf %21 : vector<34x4xf32> to vector<34x4xbf16>
    %cst_14 = arith.constant dense<0.000000e+00> : vector<34x4xf32>
    %23 = tpu.matmul %9, %22, %cst_14 {dimension_numbers = #tpu.dot_dimension_numbers<[1], [0], [0], [1], [0, 0, 1, 1], [], []>} : vector<34x34xbf16>, vector<34x4xbf16>, vector<34x4xf32> -> vector<34x4xf32>
    %24 = vector.broadcast %3 : vector<1x4xf32> to vector<34x4xf32>
    %25 = arith.addf %23, %24 : vector<34x4xf32>
    %26 = math.tanh %25 : vector<34x4xf32>
    %27 = vector.extract_strided_slice %26 {offsets = [0, 0], sizes = [34, 1], strides = [1, 1]} : vector<34x4xf32> to vector<34x1xf32>
    %28 = vector.extract_strided_slice %4 {offsets = [0, 0], sizes = [1, 2], strides = [1, 1]} : vector<4x2xf32> to vector<1x2xf32>
    %29 = vector.broadcast %27 : vector<34x1xf32> to vector<34x2xf32>
    %30 = vector.broadcast %28 : vector<1x2xf32> to vector<34x2xf32>
    %31 = arith.mulf %29, %30 : vector<34x2xf32>
    %32 = vector.extract_strided_slice %26 {offsets = [0, 1], sizes = [34, 1], strides = [1, 1]} : vector<34x4xf32> to vector<34x1xf32>
    %33 = vector.extract_strided_slice %4 {offsets = [1, 0], sizes = [1, 2], strides = [1, 1]} : vector<4x2xf32> to vector<1x2xf32>
    %34 = vector.broadcast %32 : vector<34x1xf32> to vector<34x2xf32>
    %35 = vector.broadcast %33 : vector<1x2xf32> to vector<34x2xf32>
    %36 = arith.mulf %34, %35 : vector<34x2xf32>
    %37 = arith.addf %31, %36 : vector<34x2xf32>
    %38 = vector.extract_strided_slice %26 {offsets = [0, 2], sizes = [34, 1], strides = [1, 1]} : vector<34x4xf32> to vector<34x1xf32>
    %39 = vector.extract_strided_slice %4 {offsets = [2, 0], sizes = [1, 2], strides = [1, 1]} : vector<4x2xf32> to vector<1x2xf32>
    %40 = vector.broadcast %38 : vector<34x1xf32> to vector<34x2xf32>
    %41 = vector.broadcast %39 : vector<1x2xf32> to vector<34x2xf32>
    %42 = arith.mulf %40, %41 : vector<34x2xf32>
    %43 = arith.addf %37, %42 : vector<34x2xf32>
    %44 = vector.extract_strided_slice %26 {offsets = [0, 3], sizes = [34, 1], strides = [1, 1]} : vector<34x4xf32> to vector<34x1xf32>
    %45 = vector.extract_strided_slice %4 {offsets = [3, 0], sizes = [1, 2], strides = [1, 1]} : vector<4x2xf32> to vector<1x2xf32>
    %46 = vector.broadcast %44 : vector<34x1xf32> to vector<34x2xf32>
    %47 = vector.broadcast %45 : vector<1x2xf32> to vector<34x2xf32>
    %48 = arith.mulf %46, %47 : vector<34x2xf32>
    %49 = arith.addf %43, %48 : vector<34x2xf32>
    %50 = arith.truncf %49 : vector<34x2xf32> to vector<34x2xbf16>
    %cst_15 = arith.constant dense<0.000000e+00> : vector<34x2xf32>
    %51 = tpu.matmul %9, %50, %cst_15 {dimension_numbers = #tpu.dot_dimension_numbers<[1], [0], [0], [1], [0, 0, 1, 1], [], []>} : vector<34x34xbf16>, vector<34x2xbf16>, vector<34x2xf32> -> vector<34x2xf32>
    %52 = vector.broadcast %5 : vector<1x2xf32> to vector<34x2xf32>
    %53 = arith.addf %51, %52 : vector<34x2xf32>
    %54 = math.tanh %53 : vector<34x2xf32>
    %55 = vector.extract_strided_slice %54 {offsets = [0, 0], sizes = [34, 1], strides = [1, 1]} : vector<34x2xf32> to vector<34x1xf32>
    %56 = vector.extract_strided_slice %6 {offsets = [0, 0], sizes = [1, 4], strides = [1, 1]} : vector<2x4xf32> to vector<1x4xf32>
    %57 = vector.broadcast %55 : vector<34x1xf32> to vector<34x4xf32>
    %58 = vector.broadcast %56 : vector<1x4xf32> to vector<34x4xf32>
    %59 = arith.mulf %57, %58 : vector<34x4xf32>
    %60 = vector.extract_strided_slice %54 {offsets = [0, 1], sizes = [34, 1], strides = [1, 1]} : vector<34x2xf32> to vector<34x1xf32>
    %61 = vector.extract_strided_slice %6 {offsets = [1, 0], sizes = [1, 4], strides = [1, 1]} : vector<2x4xf32> to vector<1x4xf32>
    %62 = vector.broadcast %60 : vector<34x1xf32> to vector<34x4xf32>
    %63 = vector.broadcast %61 : vector<1x4xf32> to vector<34x4xf32>
    %64 = arith.mulf %62, %63 : vector<34x4xf32>
    %65 = arith.addf %59, %64 : vector<34x4xf32>
    %66 = vector.broadcast %7 : vector<1x4xf32> to vector<34x4xf32>
    %67 = arith.addf %65, %66 : vector<34x4xf32>
    %cst_16 = arith.constant 0.000000e+00 : f32
    %68 = vector.broadcast %cst_16 : f32 to vector<34x122xf32>
    %69 = tpu.concatenate %67, %54, %68 in 1 : vector<34x4xf32>, vector<34x2xf32>, vector<34x122xf32> -> vector<34x128xf32>
    %c0_17 = arith.constant 0 : index
    %c0_18 = arith.constant 0 : index
    %70 = vector.load %arg3[%c0_17, %c0_18] : memref<34x128xf32, #tpu.memory_space<vmem>>, vector<34x128xf32>
    tpu.vector_store %arg3[%c0_17, %c0_18], %69 {strides = array<i32>} : memref<34x128xf32, #tpu.memory_space<vmem>>, vector<34x128xf32>,
    return
  }
}

</mosaic_0001>

<llo_original>
// kernel: gcn_forward.1
$region0: #{gcn_forward.1}
  #allocation0 [shape = 'u32[]', space=smem, size = 0x4, offset = 0x4, fixed_abs, tag = 'smem constant byte address 0x4 - core index']
  #allocation1 [shape = 'u32[144,128]{1,0:T(1,128)}', space=vmem, size = 0x12000, scoped, tag = 'internal scratch']
  %s0 = inlined_call_operand.hbm [shape: f32[34,34], index: 0, kind: input, shape index: {}]
  %s1 = inlined_call_operand.hbm [shape: f32[34,34], index: 1, kind: input, shape index: {}]
  %s2 = inlined_call_operand.hbm [shape: f32[104,128], index: 2, kind: input, shape index: {}]
  %s3 = inlined_call_operand.vmem [shape: f32[34,128], index: 3, kind: output, shape index: {}]
  %s4 = sld [smem:[#allocation0]]
  $region34: #{gcn_forward.1} parent=0
    _
  %s6 = ssub.s32 1, %s4
  %s7 = scalar_select 0, %s6, %s4
  $region1: #{gcn_forward.1} parent=0
    #allocation2 [shape = 'u8[20480]{0}', space=vmem, size = 0x5000, scoped, tag = 'input window, operand 0, single buffered']
    #allocation3 [shape = 's32[1]{0}', space=sflag, size = 0x4, scoped, tag = 'scoped memory for gcn_forward.1']
    #allocation4 [shape = 'u8[20480]{0}', space=vmem, size = 0x5000, scoped, tag = 'input window, operand 1, single buffered']
    #allocation5 [shape = 's32[1]{0}', space=sflag, size = 0x4, scoped, tag = 'scoped memory for gcn_forward.1']
    #allocation6 [shape = 'u8[53248]{0}', space=vmem, size = 0xd000, scoped, tag = 'input window, operand 2, single buffered']
    %8 = vsyncpa [#allocation3], 0
    %9 = vsyncpa [#allocation5], 0
    // Predicated region
    $region2: #{gcn_forward.1} parent=1 // pred_check
      _
    $region3: #{gcn_forward.1} parent=1 // pred_check_branch
      %11 = sbr.rel (0) target = $region5
    $region4: #{gcn_forward.1} parent=1 // pred_region
      %s13 = ssub.s32 640, 640
      %14 = vsyncadd [#allocation3], %s13
      %s15 = sshll.u32 [#allocation2], 4
      %s16 = int_to_ptr.vmem [resolvable:$true] %s15
      %21 = dma.hbm_to_vmem [thread:$0]  %s0, 640, %s16, [#allocation3], 128, 128, 8
    $region5: #{gcn_forward.1} parent=1 // pred_fallthru
      _
    // Predicated region
    $region6: #{gcn_forward.1} parent=1 // pred_check
      _
    $region7: #{gcn_forward.1} parent=1 // pred_check_branch
      %23 = sbr.rel (0) target = $region9
    $region8: #{gcn_forward.1} parent=1 // pred_region
      %s25 = ssub.s32 640, 640
      %26 = vsyncadd [#allocation5], %s25
      %s27 = sshll.u32 [#allocation4], 4
      %s28 = int_to_ptr.vmem [resolvable:$true] %s27
      %33 = dma.hbm_to_vmem [thread:$0]  %s1, 640, %s28, [#allocation5], 128, 128, 8
    $region9: #{gcn_forward.1} parent=1 // pred_fallthru
      _
    // Predicated region
    $region10: #{gcn_forward.1} parent=1 // pred_check
      _
    $region11: #{gcn_forward.1} parent=1 // pred_check_branch
      %35 = sbr.rel (0) target = $region13
    $region12: #{gcn_forward.1} parent=1 // pred_region
      %s37 = ssub.s32 1664, 1664
      %38 = vsyncadd [#allocation5], %s37
      %s39 = sshll.u32 [#allocation6], 4
      %s40 = int_to_ptr.vmem [resolvable:$true] %s39
      %45 = dma.hbm_to_vmem [thread:$0]  %s2, 1664, %s40, [#allocation5], 128, 128, 8
    $region13: #{gcn_forward.1} parent=1 // pred_fallthru
      _
    // Predicated region
    $region14: #{gcn_forward.1} parent=1 // pred_check
      _
    $region15: #{gcn_forward.1} parent=1 // pred_check_branch
      %47 = sbr.rel (0) target = $region17
    $region16: #{gcn_forward.1} parent=1 // pred_region
      %48 = dma.done [#allocation3], 640
    $region17: #{gcn_forward.1} parent=1 // pred_fallthru
      _
    // Predicated region
    $region18: #{gcn_forward.1} parent=1 // pred_check
      _
    $region19: #{gcn_forward.1} parent=1 // pred_check_branch
      %50 = sbr.rel (0) target = $region21
    $region20: #{gcn_forward.1} parent=1 // pred_region
      %51 = dma.done [#allocation5], 640
    $region21: #{gcn_forward.1} parent=1 // pred_fallthru
      _
    // Predicated region
    $region22: #{gcn_forward.1} parent=1 // pred_check
      _
    $region23: #{gcn_forward.1} parent=1 // pred_check_branch
      %53 = sbr.rel (0) target = $region25
    $region24: #{gcn_forward.1} parent=1 // pred_region
      %54 = dma.done [#allocation5], 1664
    $region25: #{gcn_forward.1} parent=1 // pred_fallthru
      _
    %v56 = vld [vmem:[#allocation6] sm:$0xff]
    %v57 = vld [vmem:[#allocation6 + $0x8] sm:$0xff]
    %v58 = vld [vmem:[#allocation6 + $0x10] sm:$0xff]
    %v59 = vld [vmem:[#allocation6 + $0x18] sm:$0xff]
    %v60 = vld [vmem:[#allocation6 + $0x20] sm:$0x3]
    %v61 = vld [vmem:[#allocation6 + $0x28] sm:$0x1]
    %v62 = vld [vmem:[#allocation6 + $0x30] sm:$0xff]
    %v63 = vld [vmem:[#allocation6 + $0x38] sm:$0xff]
    %v64 = vld [vmem:[#allocation6 + $0x40] sm:$0x1]
    %v65 = vld [vmem:[#allocation6 + $0x48] sm:$0xf]
    %v66 = vld [vmem:[#allocation6 + $0x50] sm:$0x1]
    %v67 = vld [vmem:[#allocation6 + $0x58] sm:$0x3]
    %v68 = vld [vmem:[#allocation6 + $0x60] sm:$0x1]
    %v69 = vld [vmem:[#allocation2] sm:$0xff]
    %v70 = vld [vmem:[#allocation2 + $0x8] sm:$0xff]
    %v71 = vld [vmem:[#allocation2 + $0x10] sm:$0xff]
    %v72 = vld [vmem:[#allocation2 + $0x18] sm:$0xff]
    %v73 = vld [vmem:[#allocation2 + $0x20] sm:$0x3]
    %v74 = vpack.c.bf16 %v70, %v69
    %v75 = vpack.c.bf16 %v72, %v71
    %v76 = vpack.c.bf16 %v73, %v73
    %v77 = vld [vmem:[#allocation4] sm:$0xff]
    %v78 = vld [vmem:[#allocation4 + $0x8] sm:$0xff]
    %v79 = vld [vmem:[#allocation4 + $0x10] sm:$0xff]
    %v80 = vld [vmem:[#allocation4 + $0x18] sm:$0xff]
    %v81 = vld [vmem:[#allocation4 + $0x20] sm:$0x3]
    %v82 = vpack.c.bf16 %v78, %v77
    %v83 = vpack.c.bf16 %v80, %v79
    %v84 = vpack.c.bf16 %v81, %v81
    %v85 = vpack.c.bf16 %v57, %v56
    %v86 = vpack.c.bf16 %v59, %v58
    %v87 = vpack.c.bf16 %v60, %v60
    %vm88 = vcmask 277504
    %v90 = vsel %vm88, %v82, 0
    %v93 = vsel %vm88, %v83, 0
    %v96 = vsel %vm88, %v84, 0
    %vm98 = vcmask 1040384
    %v100 = vsel %vm98, %v87, 0
    %102 = vmatprep.subr.bf16.mxu0 0
    %103 = vmatpush1.bf16.msra.mxu0 0
    %104 = vmatprep.subr.bf16.mxu0 0
    %105 = vmatpush1.bf16.msra.mxu0 0
    %106 = vmatprep.subr.bf16.mxu0 0
    %107 = vmatpush1.bf16.msra.mxu0 0
    %108 = vmatprep.subr.bf16.mxu0 0
    %109 = vmatpush1.bf16.msra.mxu0 0
    %110 = vmatprep.subr.bf16.mxu0 0
    %111 = vmatpush1.bf16.msra.mxu0 0
    %112 = vmatprep.subr.bf16.mxu0 0
    %113 = vmatpush1.bf16.msra.mxu0 %v100
    %114 = vmatprep.subr.bf16.mxu0 0
    %115 = vmatpush1.bf16.msra.mxu0 %v86
    %116 = vmatprep.subr.bf16.mxu0 0
    %117 = vmatpush1.bf16.msra.mxu0 %v85
    %118 = vmatprep.subr.bf16.mxu0 0
    %119 = vmatpush2.bf16.msra.mxu0 0
    %120 = vmatprep.subr.bf16.mxu0 0
    %121 = vmatpush2.bf16.msra.mxu0 0
    %122 = vmatprep.subr.bf16.mxu0 0
    %123 = vmatpush2.bf16.msra.mxu0 0
    %124 = vmatprep.subr.bf16.mxu0 0
    %125 = vmatpush2.bf16.msra.mxu0 0
    %126 = vmatprep.subr.bf16.mxu0 0
    %127 = vmatpush2.bf16.msra.mxu0 0
    %128 = vmatprep.subr.bf16.mxu0 0
    %129 = vmatpush2.bf16.msra.mxu0 0
    %130 = vmatprep.subr.bf16.mxu0 0
    %131 = vmatpush2.bf16.msra.mxu0 0
    %132 = vmatprep.subr.bf16.mxu0 0
    %133 = vmatpush2.bf16.msra.mxu0 0
    %134 = vmatprep.mubr.bf16.mxu0 0
    %135 = vmatmul.mubr.bf16.gmra.mxu0 %v90
    %v136 = vpop.f32.mrf.mxu0
    %v137 = vadd.f32 0.0, %v136
    %v138 = vpop.f32.mrf.mxu0
    %v139 = vpop.f32.mrf.mxu0
    %v140 = vadd.f32 0.0, %v139
    %v141 = vpop.f32.mrf.mxu0
    %142 = vmatprep.mubr.bf16.mxu0 0
    %143 = vmatmul.mubr.bf16.gmra.mxu0 %v93
    %v144 = vpop.f32.mrf.mxu0
    %v145 = vadd.f32 0.0, %v144
    %v146 = vpop.f32.mrf.mxu0
    %v147 = vpop.f32.mrf.mxu0
    %v148 = vadd.f32 0.0, %v147
    %v149 = vpop.f32.mrf.mxu0
    %150 = vmatprep.mubr.bf16.mxu0 0
    %151 = vmatmul.mubr.bf16.gmra.mxu0 %v96
    %v152 = vpop.f32.mrf.mxu0
    %v153 = vadd.f32 0.0, %v152
    %v154 = vpop.f32.mrf.mxu0
    %v155 = vpop.f32.mrf.mxu0
    %v156 = vpop.f32.mrf.mxu0
    %157 = vdwg.mxu0
    %v158 = vpack.c.bf16 %v140, %v137
    %v159 = vpack.c.bf16 %v148, %v145
    %v160 = vpack.c.bf16 %v153, %v153
    %v161 = vlaneseq
    %v162 = vshrl.u32 %v161, 7
    %v163 = vsub.s32 0, %v162
    %v164 = vrot.slane %v61, %v163
    %v166 = vsel %vm88, %v74, 0
    %v169 = vsel %vm88, %v75, 0
    %v172 = vsel %vm88, %v76, 0
    %v175 = vsel %vm98, %v160, 0
    %177 = vmatprep.subr.bf16.mxu0 0
    %178 = vmatpush1.bf16.msra.mxu0 0
    %179 = vmatprep.subr.bf16.mxu0 0
    %180 = vmatpush1.bf16.msra.mxu0 0
    %181 = vmatprep.subr.bf16.mxu0 0
    %182 = vmatpush1.bf16.msra.mxu0 0
    %183 = vmatprep.subr.bf16.mxu0 0
    %184 = vmatpush1.bf16.msra.mxu0 0
    %185 = vmatprep.subr.bf16.mxu0 0
    %186 = vmatpush1.bf16.msra.mxu0 0
    %187 = vmatprep.subr.bf16.mxu0 0
    %188 = vmatpush1.bf16.msra.mxu0 %v175
    %189 = vmatprep.subr.bf16.mxu0 0
    %190 = vmatpush1.bf16.msra.mxu0 %v159
    %191 = vmatprep.subr.bf16.mxu0 0
    %192 = vmatpush1.bf16.msra.mxu0 %v158
    %193 = vmatprep.subr.bf16.mxu0 0
    %194 = vmatpush2.bf16.msra.mxu0 0
    %195 = vmatprep.subr.bf16.mxu0 0
    %196 = vmatpush2.bf16.msra.mxu0 0
    %197 = vmatprep.subr.bf16.mxu0 0
    %198 = vmatpush2.bf16.msra.mxu0 0
    %199 = vmatprep.subr.bf16.mxu0 0
    %200 = vmatpush2.bf16.msra.mxu0 0
    %201 = vmatprep.subr.bf16.mxu0 0
    %202 = vmatpush2.bf16.msra.mxu0 0
    %203 = vmatprep.subr.bf16.mxu0 0
    %204 = vmatpush2.bf16.msra.mxu0 0
    %205 = vmatprep.subr.bf16.mxu0 0
    %206 = vmatpush2.bf16.msra.mxu0 0
    %207 = vmatprep.subr.bf16.mxu0 0
    %208 = vmatpush2.bf16.msra.mxu0 0
    %209 = vmatprep.mubr.bf16.mxu0 0
    %210 = vmatmul.mubr.bf16.gmra.mxu0 %v166
    %v211 = vpop.f32.mrf.mxu0
    %v212 = vadd.f32 %v164, %v211
    %v213 = vpop.f32.mrf.mxu0
    %v214 = vpop.f32.mrf.mxu0
    %v215 = vadd.f32 %v164, %v214
    %v216 = vpop.f32.mrf.mxu0
    %217 = vmatprep.mubr.bf16.mxu0 0
    %218 = vmatmul.mubr.bf16.gmra.mxu0 %v169
    %v219 = vpop.f32.mrf.mxu0
    %v220 = vadd.f32 %v164, %v219
    %v221 = vpop.f32.mrf.mxu0
    %v222 = vpop.f32.mrf.mxu0
    %v223 = vadd.f32 %v164, %v222
    %v224 = vpop.f32.mrf.mxu0
    %225 = vmatprep.mubr.bf16.mxu0 0
    %226 = vmatmul.mubr.bf16.gmra.mxu0 %v172
    %v227 = vpop.f32.mrf.mxu0
    %v228 = vadd.f32 %v164, %v227
    %v229 = vpop.f32.mrf.mxu0
    %v230 = vpop.f32.mrf.mxu0
    %v231 = vpop.f32.mrf.mxu0
    %232 = vdwg.mxu0
    %v233 = vtanh.pop %v212
    %v234 = vtanh.pop %v215
    %v235 = vtanh.pop %v220
    %v236 = vtanh.pop %v223
    %v237 = vtanh.pop %v228
    %v238 = vpack.c.bf16 %v234, %v233
    %v239 = vpack.c.bf16 %v236, %v235
    %v240 = vpack.c.bf16 %v237, %v237
    %v241 = vpack.c.bf16 %v63, %v62
    %vm242 = vcmask 130048
    %v244 = vsel %vm242, %v238, 0
    %v247 = vsel %vm242, %v239, 0
    %v250 = vsel %vm242, %v240, 0
    %252 = vmatprep.subr.bf16.mxu0 0
    %253 = vmatpush1.bf16.msra.mxu0 0
    %254 = vmatprep.subr.bf16.mxu0 0
    %255 = vmatpush1.bf16.msra.mxu0 0
    %256 = vmatprep.subr.bf16.mxu0 0
    %257 = vmatpush1.bf16.msra.mxu0 0
    %258 = vmatprep.subr.bf16.mxu0 0
    %259 = vmatpush1.bf16.msra.mxu0 0
    %260 = vmatprep.subr.bf16.mxu0 0
    %261 = vmatpush1.bf16.msra.mxu0 0
    %262 = vmatprep.subr.bf16.mxu0 0
    %263 = vmatpush1.bf16.msra.mxu0 0
    %264 = vmatprep.subr.bf16.mxu0 0
    %265 = vmatpush1.bf16.msra.mxu0 0
    %266 = vmatprep.subr.bf16.mxu0 0
    %267 = vmatpush1.bf16.msra.mxu0 %v241
    %268 = vmatprep.subr.bf16.mxu0 0
    %269 = vmatpush2.bf16.msra.mxu0 0
    %270 = vmatprep.subr.bf16.mxu0 0
    %271 = vmatpush2.bf16.msra.mxu0 0
    %272 = vmatprep.subr.bf16.mxu0 0
    %273 = vmatpush2.bf16.msra.mxu0 0
    %274 = vmatprep.subr.bf16.mxu0 0
    %275 = vmatpush2.bf16.msra.mxu0 0
    %276 = vmatprep.subr.bf16.mxu0 0
    %277 = vmatpush2.bf16.msra.mxu0 0
    %278 = vmatprep.subr.bf16.mxu0 0
    %279 = vmatpush2.bf16.msra.mxu0 0
    %280 = vmatprep.subr.bf16.mxu0 0
    %281 = vmatpush2.bf16.msra.mxu0 0
    %282 = vmatprep.subr.bf16.mxu0 0
    %283 = vmatpush2.bf16.msra.mxu0 0
    %284 = vmatprep.mubr.bf16.mxu0 0
    %285 = vmatmul.mubr.bf16.gmra.mxu0 %v244
    %v286 = vpop.f32.mrf.mxu0
    %v287 = vadd.f32 0.0, %v286
    %v288 = vpop.f32.mrf.mxu0
    %v289 = vpop.f32.mrf.mxu0
    %v290 = vadd.f32 0.0, %v289
    %v291 = vpop.f32.mrf.mxu0
    %292 = vmatprep.mubr.bf16.mxu0 0
    %293 = vmatmul.mubr.bf16.gmra.mxu0 %v247
    %v294 = vpop.f32.mrf.mxu0
    %v295 = vadd.f32 0.0, %v294
    %v296 = vpop.f32.mrf.mxu0
    %v297 = vpop.f32.mrf.mxu0
    %v298 = vadd.f32 0.0, %v297
    %v299 = vpop.f32.mrf.mxu0
    %300 = vmatprep.mubr.bf16.mxu0 0
    %301 = vmatmul.mubr.bf16.gmra.mxu0 %v250
    %v302 = vpop.f32.mrf.mxu0
    %v303 = vadd.f32 0.0, %v302
    %v304 = vpop.f32.mrf.mxu0
    %v305 = vpop.f32.mrf.mxu0
    %v306 = vpop.f32.mrf.mxu0
    %307 = vdwg.mxu0
    %v308 = vpack.c.bf16 %v290, %v287
    %v309 = vpack.c.bf16 %v298, %v295
    %v310 = vpack.c.bf16 %v303, %v303
    %v311 = vlaneseq
    %v312 = vshrl.u32 %v311, 7
    %v313 = vsub.s32 0, %v312
    %v314 = vrot.slane %v64, %v313
    %v316 = vsel %vm98, %v310, 0
    %318 = vmatprep.subr.bf16.mxu0 0
    %319 = vmatpush1.bf16.msra.mxu0 0
    %320 = vmatprep.subr.bf16.mxu0 0
    %321 = vmatpush1.bf16.msra.mxu0 0
    %322 = vmatprep.subr.bf16.mxu0 0
    %323 = vmatpush1.bf16.msra.mxu0 0
    %324 = vmatprep.subr.bf16.mxu0 0
    %325 = vmatpush1.bf16.msra.mxu0 0
    %326 = vmatprep.subr.bf16.mxu0 0
    %327 = vmatpush1.bf16.msra.mxu0 0
    %328 = vmatprep.subr.bf16.mxu0 0
    %329 = vmatpush1.bf16.msra.mxu0 %v316
    %330 = vmatprep.subr.bf16.mxu0 0
    %331 = vmatpush1.bf16.msra.mxu0 %v309
    %332 = vmatprep.subr.bf16.mxu0 0
    %333 = vmatpush1.bf16.msra.mxu0 %v308
    %334 = vmatprep.subr.bf16.mxu0 0
    %335 = vmatpush2.bf16.msra.mxu0 0
    %336 = vmatprep.subr.bf16.mxu0 0
    %337 = vmatpush2.bf16.msra.mxu0 0
    %338 = vmatprep.subr.bf16.mxu0 0
    %339 = vmatpush2.bf16.msra.mxu0 0
    %340 = vmatprep.subr.bf16.mxu0 0
    %341 = vmatpush2.bf16.msra.mxu0 0
    %342 = vmatprep.subr.bf16.mxu0 0
    %343 = vmatpush2.bf16.msra.mxu0 0
    %344 = vmatprep.subr.bf16.mxu0 0
    %345 = vmatpush2.bf16.msra.mxu0 0
    %346 = vmatprep.subr.bf16.mxu0 0
    %347 = vmatpush2.bf16.msra.mxu0 0
    %348 = vmatprep.subr.bf16.mxu0 0
    %349 = vmatpush2.bf16.msra.mxu0 0
    %350 = vmatprep.mubr.bf16.mxu0 0
    %351 = vmatmul.mubr.bf16.gmra.mxu0 %v166
    %v352 = vpop.f32.mrf.mxu0
    %v353 = vadd.f32 %v314, %v352
    %v354 = vpop.f32.mrf.mxu0
    %v355 = vpop.f32.mrf.mxu0
    %v356 = vadd.f32 %v314, %v355
    %v357 = vpop.f32.mrf.mxu0
    %358 = vmatprep.mubr.bf16.mxu0 0
    %359 = vmatmul.mubr.bf16.gmra.mxu0 %v169
    %v360 = vpop.f32.mrf.mxu0
    %v361 = vadd.f32 %v314, %v360
    %v362 = vpop.f32.mrf.mxu0
    %v363 = vpop.f32.mrf.mxu0
    %v364 = vadd.f32 %v314, %v363
    %v365 = vpop.f32.mrf.mxu0
    %366 = vmatprep.mubr.bf16.mxu0 0
    %367 = vmatmul.mubr.bf16.gmra.mxu0 %v172
    %v368 = vpop.f32.mrf.mxu0
    %v369 = vadd.f32 %v314, %v368
    %v370 = vpop.f32.mrf.mxu0
    %v371 = vpop.f32.mrf.mxu0
    %v372 = vpop.f32.mrf.mxu0
    %373 = vdwg.mxu0
    %v374 = vtanh.pop %v353
    %v375 = vtanh.pop %v356
    %v376 = vtanh.pop %v361
    %v377 = vtanh.pop %v364
    %v378 = vtanh.pop %v369
    %380 = vset.pattern.permute.xlu0 0
    %381 = vperm.xlu0 %380, %v374
    %v382 = vpop.permute.xlu0 %381
    %385 = vset.pattern.permute.xlu0 0
    %386 = vperm.xlu0 %385, %v375
    %v387 = vpop.permute.xlu0 %386
    %390 = vset.pattern.permute.xlu0 0
    %391 = vperm.xlu0 %390, %v376
    %v392 = vpop.permute.xlu0 %391
    %395 = vset.pattern.permute.xlu0 0
    %396 = vperm.xlu0 %395, %v377
    %v397 = vpop.permute.xlu0 %396
    %400 = vset.pattern.permute.xlu0 0
    %401 = vperm.xlu0 %400, %v378
    %v402 = vpop.permute.xlu0 %401
    %v404 = vlaneseq
    %v405 = vshrl.u32 %v404, 7
    %v406 = vsub.s32 0, %v405
    %v407 = vrot.slane %v65, %v406
    %v408 = vmul.f32 %v382, %v407
    %v409 = vmul.f32 %v387, %v407
    %v410 = vmul.f32 %v392, %v407
    %v411 = vmul.f32 %v397, %v407
    %v412 = vmul.f32 %v402, %v407
    %413 = vset.pattern.permute.xlu0 1
    %414 = vperm.xlu0 %413, %v374
    %v415 = vpop.permute.xlu0 %414
    %417 = vset.pattern.permute.xlu0 1
    %418 = vperm.xlu0 %417, %v375
    %v419 = vpop.permute.xlu0 %418
    %421 = vset.pattern.permute.xlu0 1
    %422 = vperm.xlu0 %421, %v376
    %v423 = vpop.permute.xlu0 %422
    %425 = vset.pattern.permute.xlu0 1
    %426 = vperm.xlu0 %425, %v377
    %v427 = vpop.permute.xlu0 %426
    %429 = vset.pattern.permute.xlu0 1
    %430 = vperm.xlu0 %429, %v378
    %v431 = vpop.permute.xlu0 %430
    %v433 = vlaneseq
    %v434 = vshrl.u32 %v433, 7
    %v435 = vsub.s32 1, %v434
    %v436 = vrot.slane %v65, %v435
    %v437 = vmul.f32 %v415, %v436
    %v438 = vmul.f32 %v419, %v436
    %v439 = vmul.f32 %v423, %v436
    %v440 = vmul.f32 %v427, %v436
    %v441 = vmul.f32 %v431, %v436
    %v442 = vadd.f32 %v408, %v437
    %v443 = vadd.f32 %v409, %v438
    %v444 = vadd.f32 %v410, %v439
    %v445 = vadd.f32 %v411, %v440
    %v446 = vadd.f32 %v412, %v441
    %447 = vset.pattern.permute.xlu0 2
    %448 = vperm.xlu0 %447, %v374
    %v449 = vpop.permute.xlu0 %448
    %451 = vset.pattern.permute.xlu0 2
    %452 = vperm.xlu0 %451, %v375
    %v453 = vpop.permute.xlu0 %452
    %455 = vset.pattern.permute.xlu0 2
    %456 = vperm.xlu0 %455, %v376
    %v457 = vpop.permute.xlu0 %456
    %459 = vset.pattern.permute.xlu0 2
    %460 = vperm.xlu0 %459, %v377
    %v461 = vpop.permute.xlu0 %460
    %463 = vset.pattern.permute.xlu0 2
    %464 = vperm.xlu0 %463, %v378
    %v465 = vpop.permute.xlu0 %464
    %v467 = vlaneseq
    %v468 = vshrl.u32 %v467, 7
    %v469 = vsub.s32 2, %v468
    %v470 = vrot.slane %v65, %v469
    %v471 = vmul.f32 %v449, %v470
    %v472 = vmul.f32 %v453, %v470
    %v473 = vmul.f32 %v457, %v470
    %v474 = vmul.f32 %v461, %v470
    %v475 = vmul.f32 %v465, %v470
    %v476 = vadd.f32 %v442, %v471
    %v477 = vadd.f32 %v443, %v472
    %v478 = vadd.f32 %v444, %v473
    %v479 = vadd.f32 %v445, %v474
    %v480 = vadd.f32 %v446, %v475
    %481 = vset.pattern.permute.xlu0 3
    %482 = vperm.xlu0 %481, %v374
    %v483 = vpop.permute.xlu0 %482
    %485 = vset.pattern.permute.xlu0 3
    %486 = vperm.xlu0 %485, %v375
    %v487 = vpop.permute.xlu0 %486
    %489 = vset.pattern.permute.xlu0 3
    %490 = vperm.xlu0 %489, %v376
    %v491 = vpop.permute.xlu0 %490
    %493 = vset.pattern.permute.xlu0 3
    %494 = vperm.xlu0 %493, %v377
    %v495 = vpop.permute.xlu0 %494
    %497 = vset.pattern.permute.xlu0 3
    %498 = vperm.xlu0 %497, %v378
    %v499 = vpop.permute.xlu0 %498
    %v501 = vlaneseq
    %v502 = vshrl.u32 %v501, 7
    %v503 = vsub.s32 3, %v502
    %v504 = vrot.slane %v65, %v503
    %v505 = vmul.f32 %v483, %v504
    %v506 = vmul.f32 %v487, %v504
    %v507 = vmul.f32 %v491, %v504
    %v508 = vmul.f32 %v495, %v504
    %v509 = vmul.f32 %v499, %v504
    %v510 = vadd.f32 %v476, %v505
    %v511 = vadd.f32 %v477, %v506
    %v512 = vadd.f32 %v478, %v507
    %v513 = vadd.f32 %v479, %v508
    %v514 = vadd.f32 %v480, %v509
    %v515 = vpack.c.bf16 %v511, %v510
    %v516 = vpack.c.bf16 %v513, %v512
    %v517 = vpack.c.bf16 %v514, %v514
    %v518 = vlaneseq
    %v519 = vshrl.u32 %v518, 7
    %v520 = vsub.s32 0, %v519
    %v521 = vrot.slane %v66, %v520
    %v523 = vsel %vm98, %v517, 0
    %525 = vmatprep.subr.bf16.mxu0 0
    %526 = vmatpush1.bf16.msra.mxu0 0
    %527 = vmatprep.subr.bf16.mxu0 0
    %528 = vmatpush1.bf16.msra.mxu0 0
    %529 = vmatprep.subr.bf16.mxu0 0
    %530 = vmatpush1.bf16.msra.mxu0 0
    %531 = vmatprep.subr.bf16.mxu0 0
    %532 = vmatpush1.bf16.msra.mxu0 0
    %533 = vmatprep.subr.bf16.mxu0 0
    %534 = vmatpush1.bf16.msra.mxu0 0
    %535 = vmatprep.subr.bf16.mxu0 0
    %536 = vmatpush1.bf16.msra.mxu0 %v523
    %537 = vmatprep.subr.bf16.mxu0 0
    %538 = vmatpush1.bf16.msra.mxu0 %v516
    %539 = vmatprep.subr.bf16.mxu0 0
    %540 = vmatpush1.bf16.msra.mxu0 %v515
    %541 = vmatprep.subr.bf16.mxu0 0
    %542 = vmatpush2.bf16.msra.mxu0 0
    %543 = vmatprep.subr.bf16.mxu0 0
    %544 = vmatpush2.bf16.msra.mxu0 0
    %545 = vmatprep.subr.bf16.mxu0 0
    %546 = vmatpush2.bf16.msra.mxu0 0
    %547 = vmatprep.subr.bf16.mxu0 0
    %548 = vmatpush2.bf16.msra.mxu0 0
    %549 = vmatprep.subr.bf16.mxu0 0
    %550 = vmatpush2.bf16.msra.mxu0 0
    %551 = vmatprep.subr.bf16.mxu0 0
    %552 = vmatpush2.bf16.msra.mxu0 0
    %553 = vmatprep.subr.bf16.mxu0 0
    %554 = vmatpush2.bf16.msra.mxu0 0
    %555 = vmatprep.subr.bf16.mxu0 0
    %556 = vmatpush2.bf16.msra.mxu0 0
    %557 = vmatprep.mubr.bf16.mxu0 0
    %558 = vmatmul.mubr.bf16.gmra.mxu0 %v166
    %v559 = vpop.f32.mrf.mxu0
    %v560 = vadd.f32 %v521, %v559
    %v561 = vpop.f32.mrf.mxu0
    %v562 = vpop.f32.mrf.mxu0
    %v563 = vadd.f32 %v521, %v562
    %v564 = vpop.f32.mrf.mxu0
    %565 = vmatprep.mubr.bf16.mxu0 0
    %566 = vmatmul.mubr.bf16.gmra.mxu0 %v169
    %v567 = vpop.f32.mrf.mxu0
    %v568 = vadd.f32 %v521, %v567
    %v569 = vpop.f32.mrf.mxu0
    %v570 = vpop.f32.mrf.mxu0
    %v571 = vadd.f32 %v521, %v570
    %v572 = vpop.f32.mrf.mxu0
    %573 = vmatprep.mubr.bf16.mxu0 0
    %574 = vmatmul.mubr.bf16.gmra.mxu0 %v172
    %v575 = vpop.f32.mrf.mxu0
    %v576 = vadd.f32 %v521, %v575
    %v577 = vpop.f32.mrf.mxu0
    %v578 = vpop.f32.mrf.mxu0
    %v579 = vpop.f32.mrf.mxu0
    %580 = vdwg.mxu0
    %v581 = vtanh.pop %v560
    %v582 = vtanh.pop %v563
    %v583 = vtanh.pop %v568
    %v584 = vtanh.pop %v571
    %v585 = vtanh.pop %v576
    %587 = vset.pattern.permute.xlu0 0
    %588 = vperm.xlu0 %587, %v581
    %v589 = vpop.permute.xlu0 %588
    %592 = vset.pattern.permute.xlu0 0
    %593 = vperm.xlu0 %592, %v582
    %v594 = vpop.permute.xlu0 %593
    %597 = vset.pattern.permute.xlu0 0
    %598 = vperm.xlu0 %597, %v583
    %v599 = vpop.permute.xlu0 %598
    %602 = vset.pattern.permute.xlu0 0
    %603 = vperm.xlu0 %602, %v584
    %v604 = vpop.permute.xlu0 %603
    %607 = vset.pattern.permute.xlu0 0
    %608 = vperm.xlu0 %607, %v585
    %v609 = vpop.permute.xlu0 %608
    %v611 = vlaneseq
    %v612 = vshrl.u32 %v611, 7
    %v613 = vsub.s32 0, %v612
    %v614 = vrot.slane %v67, %v613
    %v615 = vmul.f32 %v589, %v614
    %v616 = vmul.f32 %v594, %v614
    %v617 = vmul.f32 %v599, %v614
    %v618 = vmul.f32 %v604, %v614
    %v619 = vmul.f32 %v609, %v614
    %620 = vset.pattern.permute.xlu0 1
    %621 = vperm.xlu0 %620, %v581
    %v622 = vpop.permute.xlu0 %621
    %624 = vset.pattern.permute.xlu0 1
    %625 = vperm.xlu0 %624, %v582
    %v626 = vpop.permute.xlu0 %625
    %628 = vset.pattern.permute.xlu0 1
    %629 = vperm.xlu0 %628, %v583
    %v630 = vpop.permute.xlu0 %629
    %632 = vset.pattern.permute.xlu0 1
    %633 = vperm.xlu0 %632, %v584
    %v634 = vpop.permute.xlu0 %633
    %636 = vset.pattern.permute.xlu0 1
    %637 = vperm.xlu0 %636, %v585
    %v638 = vpop.permute.xlu0 %637
    %v640 = vlaneseq
    %v641 = vshrl.u32 %v640, 7
    %v642 = vsub.s32 1, %v641
    %v643 = vrot.slane %v67, %v642
    %v644 = vmul.f32 %v622, %v643
    %v645 = vmul.f32 %v626, %v643
    %v646 = vmul.f32 %v630, %v643
    %v647 = vmul.f32 %v634, %v643
    %v648 = vmul.f32 %v638, %v643
    %v649 = vadd.f32 %v615, %v644
    %v650 = vadd.f32 %v616, %v645
    %v651 = vadd.f32 %v617, %v646
    %v652 = vadd.f32 %v618, %v647
    %v653 = vadd.f32 %v619, %v648
    %v654 = vlaneseq
    %v655 = vshrl.u32 %v654, 7
    %v656 = vsub.s32 0, %v655
    %v657 = vrot.slane %v68, %v656
    %v658 = vadd.f32 %v649, %v657
    %v659 = vadd.f32 %v650, %v657
    %v660 = vadd.f32 %v651, %v657
    %v661 = vadd.f32 %v652, %v657
    %v662 = vadd.f32 %v653, %v657
    %663 = vrot.lane.b32.xlu0 %v581, 4
    %v664 = vpop.permute.xlu0 %663
    %665 = vrot.lane.b32.xlu0 %v582, 4
    %v666 = vpop.permute.xlu0 %665
    %667 = vrot.lane.b32.xlu0 %v583, 4
    %v668 = vpop.permute.xlu0 %667
    %669 = vrot.lane.b32.xlu0 %v584, 4
    %v670 = vpop.permute.xlu0 %669
    %671 = vrot.lane.b32.xlu0 %v585, 4
    %v672 = vpop.permute.xlu0 %671
    %vm678 = vcmask 31744
    %v679 = vsel %vm678, %v658, %v664
    %v680 = vsel %vm678, %v659, %v666
    %v681 = vsel %vm678, %v660, %v668
    %v682 = vsel %vm678, %v661, %v670
    %v683 = vsel %vm678, %v662, %v672
    %vm684 = vcmask 48128
    %v685 = vsel %vm684, %v679, 0.0
    %v686 = vsel %vm684, %v680, 0.0
    %v687 = vsel %vm684, %v681, 0.0
    %v688 = vsel %vm684, %v682, 0.0
    %v689 = vsel %vm684, %v683, 0.0
    %690 = vst [vmem:[%s3] sm:$0xff] %v685
    %691 = vst [vmem:[%s3 + $0x8] sm:$0xff] %v686
    %692 = vst [vmem:[%s3 + $0x10] sm:$0xff] %v687
    %693 = vst [vmem:[%s3 + $0x18] sm:$0xff] %v688
    %694 = vst [vmem:[%s3 + $0x20] sm:$0x3] %v689
    // Predicated region
    $region26: #{gcn_forward.1} parent=1 // pred_check
      _
    $region27: #{gcn_forward.1} parent=1 // pred_check_branch
      %696 = sbr.rel (0) target = $region29
    $region28: #{gcn_forward.1} parent=1 // pred_region
      _
    $region29: #{gcn_forward.1} parent=1 // pred_fallthru
      _
    // Predicated region
    $region30: #{gcn_forward.1} parent=1 // pred_check
      _
    $region31: #{gcn_forward.1} parent=1 // pred_check_branch
      %698 = sbr.rel (0) target = $region33
    $region32: #{gcn_forward.1} parent=1 // pred_region
      _
    $region33: #{gcn_forward.1} parent=1 // pred_fallthru
      _
    %699 = vsyncpa [#allocation3], 1
    %700 = vsyncpa [#allocation5], 1

</llo_original>
